<compile_context>
chip_gen: v7x
topology: tpu7x:2x2x1
jax: 0.10.0
libtpu: 0.0.40
codegen_flags: <defaults>
</compile_context>

<pallas_src>
import jax
import jax.numpy as jnp
from jax.experimental import pallas as pl
from jax.experimental.pallas import tpu as pltpu


def _decoder_fused_kernel(x_ref, w1_ref, b1_ref, w2_ref, b2_ref, o_ref):
    # x_ref : (Cin, M)      w1_ref: (K1, Cin)   b1_ref: (K1, 1)
    # w2_ref: (K2, K1)      b2_ref: (K2, 1)     o_ref : (K2, M)
    y1 = jnp.dot(w1_ref[...], x_ref[...], preferred_element_type=jnp.float32)
    y1 = jnp.maximum(y1 + b1_ref[...], 0.0)                     # ReLU, stays in VMEM
    y2 = jnp.dot(w2_ref[...], y1, preferred_element_type=jnp.float32)
    y2 = jax.nn.sigmoid(y2 + b2_ref[...])
    o_ref[...] = y2.astype(o_ref.dtype)


def _build_fused_weights(params):
    """Reshape PyTorch ConvTranspose2d weights into the fused matmul operands."""
    w1, b1 = params["w1"], params["b1"]   # (4,16,2,2), (16,)
    w2, b2 = params["w2"], params["b2"]   # (16,1,2,2), (1,)
    Cin, Cmid, kH, kW = w1.shape
    K1 = kH * kW * Cmid                   # 64, row index r1 = (kh1, kw1, c)
    K2 = kH * kW * kH * kW                # 16, row index r2 = (kh1, kw1, kh2, kw2)

    # W1_t[r1, ci] = w1[ci, c, kh1, kw1]
    w1_t = jnp.transpose(w1, (2, 3, 1, 0)).reshape(K1, Cin)
    b1_t = jnp.tile(b1, kH * kW).reshape(K1, 1)

    # W2_t[r2, r1] = w2[c, 0, kh2, kw2] if (kh1,kw1) of r2 == (kh1,kw1) of r1 else 0
    w2_taps = jnp.transpose(w2[:, 0, :, :], (1, 2, 0)).reshape(kH * kW, Cmid)
    eye = jnp.eye(kH * kW, dtype=w2.dtype)
    w2_t = jnp.einsum("gG,tc->gtGc", eye, w2_taps).reshape(K2, K1)
    b2_t = jnp.broadcast_to(b2.reshape(1, 1), (K2, 1))
    return w1_t, b1_t, w2_t, b2_t


def decoder_forward(x_nchw, params):
    N, Cin, H, W = x_nchw.shape
    M = N * H * W
    # Lane-dense layout requires M % 128 == 0 (holds for the shapes used here: 512).
    assert M % 128 == 0, M

    x_t = jnp.transpose(x_nchw, (1, 0, 2, 3)).reshape(Cin, M)   # (Cin, M), 8 KB
    w1_t, b1_t, w2_t, b2_t = _build_fused_weights(params)
    K1, K2 = w1_t.shape[0], w2_t.shape[0]

    out_t = pl.pallas_call(
        _decoder_fused_kernel,
        out_shape=jax.ShapeDtypeStruct((K2, M), x_nchw.dtype),
        grid_spec=pltpu.PrefetchScalarGridSpec(
            num_scalar_prefetch=0,
            grid=(1,),                                           # whole problem in one step
            in_specs=[
                pl.BlockSpec((Cin, M), lambda i: (0, 0)),
                pl.BlockSpec((K1, Cin), lambda i: (0, 0)),
                pl.BlockSpec((K1, 1), lambda i: (0, 0)),
                pl.BlockSpec((K2, K1), lambda i: (0, 0)),
                pl.BlockSpec((K2, 1), lambda i: (0, 0)),
            ],
            out_specs=pl.BlockSpec((K2, M), lambda i: (0, 0)),
        ),
        compiler_params=pltpu.CompilerParams(
            dimension_semantics=("arbitrary",)),
    )(x_t, w1_t, b1_t, w2_t, b2_t)

    # out_t: (16, M); rows = (kh1, kw1, kh2, kw2), cols = (n, h, w).
    # Output pixel: row 4h + 2*kh1 + kh2, col 4w + 2*kw1 + kw2, channel 0.
    y = out_t.reshape(2, 2, 2, 2, N, H, W)
    y = jnp.transpose(y, (4, 5, 0, 2, 6, 1, 3))   # (n, h, kh1, kh2, w, kw1, kw2) -- 32 KB
    return y.reshape(N, 1, 4 * H, 4 * W)          # already NCHW, no extra transpose


# ---- pure-JAX reference (same math, direct einsum) for a sanity check ----
def _tconv_ref(x_nchw, w, b):
    # out[n, co, 2h+kh, 2w+kw] = sum_ci x[n,ci,h,w] * w[ci,co,kh,kw] + b[co]
    N, Cin, H, W_ = x_nchw.shape
    _, Cout, kH, kW = w.shape
    y = jnp.einsum("nihw,iokl->nohkwl", x_nchw, w)
    y = y.reshape(N, Cout, H * kH, W_ * kW)
    return y + b[None, :, None, None]


def decoder_ref(x_nchw, params):
    x = jnp.maximum(_tconv_ref(x_nchw, params["w1"], params["b1"]), 0.0)
    x = jax.nn.sigmoid(_tconv_ref(x, params["w2"], params["b2"]))
    return x


def init_params(key):
    k1, k2, k3, k4 = jax.random.split(key, 4)
    return {
        # PyTorch ConvTranspose2d weight shape: (in_channels, out_channels, kH, kW)
        "w1": 0.1 * jax.random.normal(k1, (4, 16, 2, 2), jnp.float32),
        "b1": 0.1 * jax.random.normal(k2, (16,), jnp.float32),
        "w2": 0.1 * jax.random.normal(k3, (16, 1, 2, 2), jnp.float32),
        "b2": 0.1 * jax.random.normal(k4, (1,), jnp.float32),
    }


if __name__ == "__main__":
    key = jax.random.PRNGKey(0)
    pkey, xkey = jax.random.split(key)
    params = init_params(pkey)

    # Latent input: (N=2, C=4, H=16, W=16)  ->  output (2, 1, 64, 64)
    x = jax.random.normal(xkey, (2, 4, 16, 16), jnp.float32)

    out = jax.jit(decoder_forward)(x, params)
    out = jax.block_until_ready(out)

    ref = decoder_ref(x, params)
    assert out.shape == (2, 1, 64, 64), out.shape
    assert jnp.allclose(out, ref, atol=1e-4, rtol=1e-4), float(
        jnp.max(jnp.abs(out - ref)))

    print("KERNEL_OK")
</pallas_src>

<mosaic_0001>
module attributes {stable_mosaic.version = 11 : i64} {
  func.func @_decoder_fused_kernel(%arg0: i32, %arg1: memref<4x512xf32, #tpu.memory_space<vmem>>, %arg2: memref<64x4xf32, #tpu.memory_space<vmem>>, %arg3: memref<64x1xf32, #tpu.memory_space<vmem>>, %arg4: memref<16x64xf32, #tpu.memory_space<vmem>>, %arg5: memref<16x1xf32, #tpu.memory_space<vmem>>, %arg6: memref<16x512xf32, #tpu.memory_space<vmem>>) attributes {dimension_semantics = [#tpu.dimension_semantics<arbitrary>], iteration_bounds = array<i64: 1>, scalar_prefetch = 0 : i64, scratch_operands = 0 : i64, tpu.core_type = #tpu.core_type<tc>, window_params = [{pipeline_mode = #tpu.pipeline_mode<synchronous>, transform_indices = @transform_0, window_bounds = array<i64: 4, 512>}, {pipeline_mode = #tpu.pipeline_mode<synchronous>, transform_indices = @transform_1, window_bounds = array<i64: 64, 4>}, {pipeline_mode = #tpu.pipeline_mode<synchronous>, transform_indices = @transform_2, window_bounds = array<i64: 64, 1>}, {pipeline_mode = #tpu.pipeline_mode<synchronous>, transform_indices = @transform_3, window_bounds = array<i64: 16, 64>}, {pipeline_mode = #tpu.pipeline_mode<synchronous>, transform_indices = @transform_4, window_bounds = array<i64: 16, 1>}, {pipeline_mode = #tpu.pipeline_mode<synchronous>, transform_indices = @transform_5, window_bounds = array<i64: 16, 512>}]} {
    %c0 = arith.constant 0 : index
    %c0_0 = arith.constant 0 : index
    %0 = vector.load %arg2[%c0, %c0_0] : memref<64x4xf32, #tpu.memory_space<vmem>>, vector<64x4xf32>
    %c0_1 = arith.constant 0 : index
    %c0_2 = arith.constant 0 : index
    %1 = vector.load %arg1[%c0_1, %c0_2] : memref<4x512xf32, #tpu.memory_space<vmem>>, vector<4x512xf32>
    %cst = arith.constant dense<0.000000e+00> : vector<64x512xf32>
    %2 = tpu.matmul %0, %1, %cst {dimension_numbers = #tpu.dot_dimension_numbers<[1], [0], [0], [1], [0, 0, 1, 1], [], []>} : vector<64x4xf32>, vector<4x512xf32>, vector<64x512xf32> -> vector<64x512xf32>
    %c0_3 = arith.constant 0 : index
    %c0_4 = arith.constant 0 : index
    %3 = vector.load %arg3[%c0_3, %c0_4] : memref<64x1xf32, #tpu.memory_space<vmem>>, vector<64x1xf32>
    %4 = vector.broadcast %3 : vector<64x1xf32> to vector<64x512xf32>
    %5 = arith.addf %2, %4 : vector<64x512xf32>
    %cst_5 = arith.constant 0.000000e+00 : f32
    %6 = vector.broadcast %cst_5 : f32 to vector<64x512xf32>
    %7 = arith.maximumf %5, %6 : vector<64x512xf32>
    %c0_6 = arith.constant 0 : index
    %c0_7 = arith.constant 0 : index
    %8 = vector.load %arg4[%c0_6, %c0_7] : memref<16x64xf32, #tpu.memory_space<vmem>>, vector<16x64xf32>
    %cst_8 = arith.constant dense<0.000000e+00> : vector<16x512xf32>
    %9 = tpu.matmul %8, %7, %cst_8 {dimension_numbers = #tpu.dot_dimension_numbers<[1], [0], [0], [1], [0, 0, 1, 1], [], []>} : vector<16x64xf32>, vector<64x512xf32>, vector<16x512xf32> -> vector<16x512xf32>
    %c0_9 = arith.constant 0 : index
    %c0_10 = arith.constant 0 : index
    %10 = vector.load %arg5[%c0_9, %c0_10] : memref<16x1xf32, #tpu.memory_space<vmem>>, vector<16x1xf32>
    %11 = vector.broadcast %10 : vector<16x1xf32> to vector<16x512xf32>
    %12 = arith.addf %9, %11 : vector<16x512xf32>
    %13 = arith.negf %12 : vector<16x512xf32>
    %14 = math.exp %13 : vector<16x512xf32>
    %cst_11 = arith.constant 1.000000e+00 : f32
    %15 = vector.broadcast %cst_11 : f32 to vector<16x512xf32>
    %16 = arith.addf %15, %14 : vector<16x512xf32>
    %17 = arith.divf %15, %16 : vector<16x512xf32>
    %c0_12 = arith.constant 0 : index
    %c0_13 = arith.constant 0 : index
    %18 = vector.load %arg6[%c0_12, %c0_13] : memref<16x512xf32, #tpu.memory_space<vmem>>, vector<16x512xf32>
    tpu.vector_store %arg6[%c0_12, %c0_13], %17 {strides = array<i32>} : memref<16x512xf32, #tpu.memory_space<vmem>>, vector<16x512xf32>,
    return
  }
  func.func @transform_0(%arg0: i32) -> (i32, i32) {
    %c0_i32 = arith.constant 0 : i32
    %c0_i32_0 = arith.constant 0 : i32
    %c0_i32_1 = arith.constant 0 : i32
    return %c0_i32, %c0_i32_0 : i32, i32
  }
  func.func @transform_1(%arg0: i32) -> (i32, i32) {
    %c0_i32 = arith.constant 0 : i32
    %c0_i32_0 = arith.constant 0 : i32
    %c0_i32_1 = arith.constant 0 : i32
    return %c0_i32, %c0_i32_0 : i32, i32
  }
  func.func @transform_2(%arg0: i32) -> (i32, i32) {
    %c0_i32 = arith.constant 0 : i32
    %c0_i32_0 = arith.constant 0 : i32
    %c0_i32_1 = arith.constant 0 : i32
    return %c0_i32, %c0_i32_0 : i32, i32
  }
  func.func @transform_3(%arg0: i32) -> (i32, i32) {
    %c0_i32 = arith.constant 0 : i32
    %c0_i32_0 = arith.constant 0 : i32
    %c0_i32_1 = arith.constant 0 : i32
    return %c0_i32, %c0_i32_0 : i32, i32
  }
  func.func @transform_4(%arg0: i32) -> (i32, i32) {
    %c0_i32 = arith.constant 0 : i32
    %c0_i32_0 = arith.constant 0 : i32
    %c0_i32_1 = arith.constant 0 : i32
    return %c0_i32, %c0_i32_0 : i32, i32
  }
  func.func @transform_5(%arg0: i32) -> (i32, i32) {
    %c0_i32 = arith.constant 0 : i32
    %c0_i32_0 = arith.constant 0 : i32
    %c0_i32_1 = arith.constant 0 : i32
    return %c0_i32, %c0_i32_0 : i32, i32
  }
}

</mosaic_0001>

<llo_original>
// kernel: tile.8
$region0: #{tile.8}
  #allocation2 [shape = 's32[1]{0}', space=sflag, size = 0x4, scoped, tag = 'scoped memory for tile.8']
  %s0 = inlined_call_operand.hbm [shape: f32[16], index: 0, kind: input, shape index: {}]
  %s1 = inlined_call_operand.vmem [shape: f32[4,16], index: 1, kind: output, shape index: {}]
  $region1: #{tile.8} parent=0
    #allocation0 [shape = 'u8[512]{0}', space=vmem, size = 0x400, scoped, tag = 'operand span for operand 0']
    #allocation1 [shape = 's32[1]{0}', space=sflag, size = 0x4, scoped, tag = 'scoped memory for tile.8']
    %2 = vsyncpa [#allocation1], 0
    // Predicated region
    $region2: #{tile.8} parent=1 // pred_check
      _
    $region3: #{tile.8} parent=1 // pred_check_branch
      %4 = sbr.rel (0) target = $region5
    $region4: #{tile.8} parent=1 // pred_region
      %s6 = ssub.s32 16, 16
      %7 = vsyncadd [#allocation1], %s6
      %s9 = sshll.u32 [#allocation0], 4
      %s10 = int_to_ptr.vmem [resolvable:$true] %s9
      %12 = dma.hbm_to_vmem [thread:$0]  %s0, 16, %s10, [#allocation1]
    $region5: #{tile.8} parent=1 // pred_fallthru
      _
    // Predicated region
    $region6: #{tile.8} parent=1 // pred_check
      _
    $region7: #{tile.8} parent=1 // pred_check_branch
      %14 = sbr.rel (0) target = $region9
    $region8: #{tile.8} parent=1 // pred_region
      %15 = dma.done [#allocation1], 16
    $region9: #{tile.8} parent=1 // pred_fallthru
      _
    %v16 = vld [vmem:[#allocation0] ss:$0 sm:$0xff]
    %17 = vst [vmem:[%s1] sm:$0xf] %v16
    %18 = vsyncpa [#allocation1], 1

// kernel: tile.0
$region0: #{tile.0}
  %s0 = inlined_call_operand.vmem [shape: f32[4,16], index: 0, kind: input, shape index: {}]
  %s1 = inlined_call_operand.vmem [shape: f32[64,1], index: 1, kind: output, shape index: {}]
  $region1: #{tile.0} parent=0
    #allocation0 [shape = 'u8[4096]{0}', space=vmem, size = 0x1000, scoped, tag = 'scoped mem for input reshape']
    %s3 = sshllo.u32 0, 4
    %v4 = vld [vmem:[%s0] sm:%s3]
    %5 = vst [vmem:[#allocation0] sm:%s3] %v4
    %v6 = vld [vmem:[#allocation0] sm:$0xf]
    %vm7 = vcmask 7168
    %8 = vst.msk [vmem:[%s1] ss:$16 sm:$0x3] %vm7, %v6
    %9 = vst.msk [vmem:[%s1] ss:$16 sm:$0xc] %vm7, %v6
    %v10 = vld [vmem:[#allocation0] sm:$0xf]
    %11 = vrot.lane.b32.xlu0 %v10, 127
    %v12 = vpop.permute.xlu0 %11
    %vm13 = vcmask 7168
    %s14 = scalar_lea.vmem %s1, 1
    %15 = vst.msk [vmem:[%s14] ss:$16 sm:$0x3] %vm13, %v12
    %s16 = scalar_lea.vmem %s1, 1
    %17 = vst.msk [vmem:[%s16] ss:$16 sm:$0xc] %vm13, %v12
    %v18 = vld [vmem:[#allocation0] sm:$0xf]
    %19 = vrot.lane.b32.xlu0 %v18, 126
    %v20 = vpop.permute.xlu0 %19
    %vm21 = vcmask 7168
    %s22 = scalar_lea.vmem %s1, 2
    %23 = vst.msk [vmem:[%s22] ss:$16 sm:$0x3] %vm21, %v20
    %s24 = scalar_lea.vmem %s1, 2
    %25 = vst.msk [vmem:[%s24] ss:$16 sm:$0xc] %vm21, %v20
    %v26 = vld [vmem:[#allocation0] sm:$0xf]
    %27 = vrot.lane.b32.xlu0 %v26, 125
    %v28 = vpop.permute.xlu0 %27
    %vm29 = vcmask 7168
    %s30 = scalar_lea.vmem %s1, 3
    %31 = vst.msk [vmem:[%s30] ss:$16 sm:$0x3] %vm29, %v28
    %s32 = scalar_lea.vmem %s1, 3
    %33 = vst.msk [vmem:[%s32] ss:$16 sm:$0xc] %vm29, %v28
    %v34 = vld [vmem:[#allocation0] sm:$0xf]
    %35 = vrot.lane.b32.xlu0 %v34, 124
    %v36 = vpop.permute.xlu0 %35
    %vm37 = vcmask 7168
    %s38 = scalar_lea.vmem %s1, 4
    %39 = vst.msk [vmem:[%s38] ss:$16 sm:$0x3] %vm37, %v36
    %s40 = scalar_lea.vmem %s1, 4
    %41 = vst.msk [vmem:[%s40] ss:$16 sm:$0xc] %vm37, %v36
    %v42 = vld [vmem:[#allocation0] sm:$0xf]
    %43 = vrot.lane.b32.xlu0 %v42, 123
    %v44 = vpop.permute.xlu0 %43
    %vm45 = vcmask 7168
    %s46 = scalar_lea.vmem %s1, 5
    %47 = vst.msk [vmem:[%s46] ss:$16 sm:$0x3] %vm45, %v44
    %s48 = scalar_lea.vmem %s1, 5
    %49 = vst.msk [vmem:[%s48] ss:$16 sm:$0xc] %vm45, %v44
    %v50 = vld [vmem:[#allocation0] sm:$0xf]
    %51 = vrot.lane.b32.xlu0 %v50, 122
    %v52 = vpop.permute.xlu0 %51
    %vm53 = vcmask 7168
    %s54 = scalar_lea.vmem %s1, 6
    %55 = vst.msk [vmem:[%s54] ss:$16 sm:$0x3] %vm53, %v52
    %s56 = scalar_lea.vmem %s1, 6
    %57 = vst.msk [vmem:[%s56] ss:$16 sm:$0xc] %vm53, %v52
    %v58 = vld [vmem:[#allocation0] sm:$0xf]
    %59 = vrot.lane.b32.xlu0 %v58, 121
    %v60 = vpop.permute.xlu0 %59
    %vm61 = vcmask 7168
    %s62 = scalar_lea.vmem %s1, 7
    %63 = vst.msk [vmem:[%s62] ss:$16 sm:$0x3] %vm61, %v60
    %s64 = scalar_lea.vmem %s1, 7
    %65 = vst.msk [vmem:[%s64] ss:$16 sm:$0xc] %vm61, %v60
    %v66 = vld [vmem:[#allocation0] sm:$0xf]
    %67 = vrot.lane.b32.xlu0 %v66, 120
    %v68 = vpop.permute.xlu0 %67
    %vm69 = vcmask 7168
    %s70 = scalar_lea.vmem %s1, 8
    %71 = vst.msk [vmem:[%s70] ss:$16 sm:$0x3] %vm69, %v68
    %s72 = scalar_lea.vmem %s1, 8
    %73 = vst.msk [vmem:[%s72] ss:$16 sm:$0xc] %vm69, %v68
    %v74 = vld [vmem:[#allocation0] sm:$0xf]
    %75 = vrot.lane.b32.xlu0 %v74, 119
    %v76 = vpop.permute.xlu0 %75
    %vm77 = vcmask 7168
    %s78 = scalar_lea.vmem %s1, 9
    %79 = vst.msk [vmem:[%s78] ss:$16 sm:$0x3] %vm77, %v76
    %s80 = scalar_lea.vmem %s1, 9
    %81 = vst.msk [vmem:[%s80] ss:$16 sm:$0xc] %vm77, %v76
    %v82 = vld [vmem:[#allocation0] sm:$0xf]
    %83 = vrot.lane.b32.xlu0 %v82, 118
    %v84 = vpop.permute.xlu0 %83
    %vm85 = vcmask 7168
    %s86 = scalar_lea.vmem %s1, 10
    %87 = vst.msk [vmem:[%s86] ss:$16 sm:$0x3] %vm85, %v84
    %s88 = scalar_lea.vmem %s1, 10
    %89 = vst.msk [vmem:[%s88] ss:$16 sm:$0xc] %vm85, %v84
    %v90 = vld [vmem:[#allocation0] sm:$0xf]
    %91 = vrot.lane.b32.xlu0 %v90, 117
    %v92 = vpop.permute.xlu0 %91
    %vm93 = vcmask 7168
    %s94 = scalar_lea.vmem %s1, 11
    %95 = vst.msk [vmem:[%s94] ss:$16 sm:$0x3] %vm93, %v92
    %s96 = scalar_lea.vmem %s1, 11
    %97 = vst.msk [vmem:[%s96] ss:$16 sm:$0xc] %vm93, %v92
    %v98 = vld [vmem:[#allocation0] sm:$0xf]
    %99 = vrot.lane.b32.xlu0 %v98, 116
    %v100 = vpop.permute.xlu0 %99
    %vm101 = vcmask 7168
    %s102 = scalar_lea.vmem %s1, 12
    %103 = vst.msk [vmem:[%s102] ss:$16 sm:$0x3] %vm101, %v100
    %s104 = scalar_lea.vmem %s1, 12
    %105 = vst.msk [vmem:[%s104] ss:$16 sm:$0xc] %vm101, %v100
    %v106 = vld [vmem:[#allocation0] sm:$0xf]
    %107 = vrot.lane.b32.xlu0 %v106, 115
    %v108 = vpop.permute.xlu0 %107
    %vm109 = vcmask 7168
    %s110 = scalar_lea.vmem %s1, 13
    %111 = vst.msk [vmem:[%s110] ss:$16 sm:$0x3] %vm109, %v108
    %s112 = scalar_lea.vmem %s1, 13
    %113 = vst.msk [vmem:[%s112] ss:$16 sm:$0xc] %vm109, %v108
    %v114 = vld [vmem:[#allocation0] sm:$0xf]
    %115 = vrot.lane.b32.xlu0 %v114, 114
    %v116 = vpop.permute.xlu0 %115
    %vm117 = vcmask 7168
    %s118 = scalar_lea.vmem %s1, 14
    %119 = vst.msk [vmem:[%s118] ss:$16 sm:$0x3] %vm117, %v116
    %s120 = scalar_lea.vmem %s1, 14
    %121 = vst.msk [vmem:[%s120] ss:$16 sm:$0xc] %vm117, %v116
    %v122 = vld [vmem:[#allocation0] sm:$0xf]
    %123 = vrot.lane.b32.xlu0 %v122, 113
    %v124 = vpop.permute.xlu0 %123
    %vm125 = vcmask 7168
    %s126 = scalar_lea.vmem %s1, 15
    %127 = vst.msk [vmem:[%s126] ss:$16 sm:$0x3] %vm125, %v124
    %s128 = scalar_lea.vmem %s1, 15
    %129 = vst.msk [vmem:[%s128] ss:$16 sm:$0xc] %vm125, %v124

// kernel: decoder_forward.1
$region0: #{decoder_forward.1}
  #allocation0 [shape = 'u32[]', space=smem, size = 0x4, offset = 0x4, fixed_abs, tag = 'smem constant byte address 0x4 - core index']
  #allocation1 [shape = 'u32[144,128]{1,0:T(1,128)}', space=vmem, size = 0x12000, scoped, tag = 'internal scratch']
  %s0 = inlined_call_operand.vmem [shape: f32[4,512], index: 0, kind: input, shape index: {}]
  %s1 = inlined_call_operand.vmem [shape: f32[64,4], index: 1, kind: input, shape index: {}]
  %s2 = inlined_call_operand.vmem [shape: f32[64,1], index: 2, kind: input, shape index: {}]
  %s3 = inlined_call_operand.vmem [shape: f32[16,64], index: 3, kind: input, shape index: {}]
  %s4 = inlined_call_operand.vmem [shape: f32[16,1], index: 4, kind: input, shape index: {}]
  %s5 = inlined_call_operand.vmem [shape: f32[16,512], index: 5, kind: output, shape index: {}]
  %s6 = sld [smem:[#allocation0]]
  $region30: #{decoder_forward.1} parent=0
    _
  %s8 = ssub.s32 1, %s6
  %s9 = scalar_select 0, %s8, %s6
  // Predicated region
  $region2: #{decoder_forward.1} parent=0 // pred_check
    _
  $region3: #{decoder_forward.1} parent=0 // pred_check_branch
    %11 = sbr.rel (0) target = $region5
  $region4: #{decoder_forward.1} parent=0 // pred_region
    _
  $region5: #{decoder_forward.1} parent=0 // pred_fallthru
    _
  // Predicated region
  $region6: #{decoder_forward.1} parent=0 // pred_check
    _
  $region7: #{decoder_forward.1} parent=0 // pred_check_branch
    %13 = sbr.rel (0) target = $region9
  $region8: #{decoder_forward.1} parent=0 // pred_region
    _
  $region9: #{decoder_forward.1} parent=0 // pred_fallthru
    _
  // Predicated region
  $region10: #{decoder_forward.1} parent=0 // pred_check
    _
  $region11: #{decoder_forward.1} parent=0 // pred_check_branch
    %15 = sbr.rel (0) target = $region13
  $region12: #{decoder_forward.1} parent=0 // pred_region
    _
  $region13: #{decoder_forward.1} parent=0 // pred_fallthru
    _
  // Predicated region
  $region14: #{decoder_forward.1} parent=0 // pred_check
    _
  $region15: #{decoder_forward.1} parent=0 // pred_check_branch
    %17 = sbr.rel (0) target = $region17
  $region16: #{decoder_forward.1} parent=0 // pred_region
    _
  $region17: #{decoder_forward.1} parent=0 // pred_fallthru
    _
  // Predicated region
  $region18: #{decoder_forward.1} parent=0 // pred_check
    _
  $region19: #{decoder_forward.1} parent=0 // pred_check_branch
    %19 = sbr.rel (0) target = $region21
  $region20: #{decoder_forward.1} parent=0 // pred_region
    _
  $region21: #{decoder_forward.1} parent=0 // pred_fallthru
    _
  %v20 = vld [vmem:[%s1] sm:$0xff]
  %v21 = vld [vmem:[%s1 + $0x8] sm:$0xff]
  %v22 = vld [vmem:[%s1 + $0x10] sm:$0xff]
  %v23 = vld [vmem:[%s1 + $0x18] sm:$0xff]
  %v24 = vld [vmem:[%s1 + $0x20] sm:$0xff]
  %v25 = vld [vmem:[%s1 + $0x28] sm:$0xff]
  %v26 = vld [vmem:[%s1 + $0x30] sm:$0xff]
  %v27 = vld [vmem:[%s1 + $0x38] sm:$0xff]
  %v28 = vld [vmem:[%s0] sm:$0xff]
  %v29 = vld [vmem:[%s0 + $0x8] sm:$0xff]
  %v30 = vld [vmem:[%s2] sm:$0xff]
  %v31 = vld [vmem:[%s2 + $0x8] sm:$0xff]
  %v32 = vld [vmem:[%s2 + $0x10] sm:$0xff]
  %v33 = vld [vmem:[%s2 + $0x18] sm:$0xff]
  %v34 = vld [vmem:[%s2 + $0x20] sm:$0xff]
  %v35 = vld [vmem:[%s2 + $0x28] sm:$0xff]
  %v36 = vld [vmem:[%s2 + $0x30] sm:$0xff]
  %v37 = vld [vmem:[%s2 + $0x38] sm:$0xff]
  %39 = vset.pattern.permute.xlu0 0
  %40 = vperm.xlu0 %39, %v30
  %v41 = vpop.permute.xlu0 %40
  %44 = vset.pattern.permute.xlu0 0
  %45 = vperm.xlu0 %44, %v31
  %v46 = vpop.permute.xlu0 %45
  %49 = vset.pattern.permute.xlu0 0
  %50 = vperm.xlu0 %49, %v32
  %v51 = vpop.permute.xlu0 %50
  %54 = vset.pattern.permute.xlu0 0
  %55 = vperm.xlu0 %54, %v33
  %v56 = vpop.permute.xlu0 %55
  %59 = vset.pattern.permute.xlu0 0
  %60 = vperm.xlu0 %59, %v34
  %v61 = vpop.permute.xlu0 %60
  %64 = vset.pattern.permute.xlu0 0
  %65 = vperm.xlu0 %64, %v35
  %v66 = vpop.permute.xlu0 %65
  %69 = vset.pattern.permute.xlu0 0
  %70 = vperm.xlu0 %69, %v36
  %v71 = vpop.permute.xlu0 %70
  %74 = vset.pattern.permute.xlu0 0
  %75 = vperm.xlu0 %74, %v37
  %v76 = vpop.permute.xlu0 %75
  %v80 = vcombine.high %v28, %v28
  %v81 = vcombine.high %v29, %v29
  %vm82 = vcmask 31744
  %v84 = vsel %vm82, %v20, 0
  %v87 = vsel %vm82, %v21, 0
  %v90 = vsel %vm82, %v22, 0
  %v93 = vsel %vm82, %v23, 0
  %v96 = vsel %vm82, %v24, 0
  %v99 = vsel %vm82, %v25, 0
  %v102 = vsel %vm82, %v26, 0
  %v105 = vsel %vm82, %v27, 0
  %vm107 = vcmask 1043456
  %v108 = vsel %vm107, %v28, 0
  %v110 = vsel %vm107, %v80, 0
  %v112 = vsel %vm107, %v29, 0
  %v114 = vsel %vm107, %v81, 0
  %116 = vmatprep.subr.mxu0 %v110
  %117 = vmatpush1.msra.mxu0 %v108
  %118 = vmatprep.subr.mxu0 0.0
  %119 = vmatpush1.msra.mxu0 0.0
  %120 = vmatprep.subr.mxu0 0.0
  %121 = vmatpush1.msra.mxu0 0.0
  %122 = vmatprep.subr.mxu0 0.0
  %123 = vmatpush1.msra.mxu0 0.0
  %124 = vmatprep.subr.mxu0 0.0
  %125 = vmatpush1.msra.mxu0 0.0
  %126 = vmatprep.subr.mxu0 0.0
  %127 = vmatpush1.msra.mxu0 0.0
  %128 = vmatprep.subr.mxu0 0.0
  %129 = vmatpush1.msra.mxu0 0.0
  %130 = vmatprep.subr.mxu0 0.0
  %131 = vmatpush1.msra.mxu0 0.0
  %132 = vmatprep.subr.mxu0 0.0
  %133 = vmatpush1.msra.mxu0 0.0
  %134 = vmatprep.subr.mxu0 0.0
  %135 = vmatpush1.msra.mxu0 0.0
  %136 = vmatprep.subr.mxu0 0.0
  %137 = vmatpush1.msra.mxu0 0.0
  %138 = vmatprep.subr.mxu0 0.0
  %139 = vmatpush1.msra.mxu0 0.0
  %140 = vmatprep.subr.mxu0 0.0
  %141 = vmatpush1.msra.mxu0 0.0
  %142 = vmatprep.subr.mxu0 0.0
  %143 = vmatpush1.msra.mxu0 0.0
  %144 = vmatprep.subr.mxu0 0.0
  %145 = vmatpush1.msra.mxu0 0.0
  %146 = vmatprep.subr.mxu0 0.0
  %147 = vmatpush1.msra.mxu0 0.0
  %148 = vmatprep.subr.mxu0 0.0
  %149 = vmatpush1.msra.mxu0 0.0
  %150 = vmatprep.subr.mxu0 0.0
  %151 = vmatpush1.msra.mxu0 0.0
  %152 = vmatprep.subr.mxu0 0.0
  %153 = vmatpush1.msra.mxu0 0.0
  %154 = vmatprep.subr.mxu0 0.0
  %155 = vmatpush1.msra.mxu0 0.0
  %156 = vmatprep.subr.mxu0 0.0
  %157 = vmatpush1.msra.mxu0 0.0
  %158 = vmatprep.subr.mxu0 0.0
  %159 = vmatpush1.msra.mxu0 0.0
  %160 = vmatprep.subr.mxu0 0.0
  %161 = vmatpush1.msra.mxu0 0.0
  %162 = vmatprep.subr.mxu0 0.0
  %163 = vmatpush1.msra.mxu0 0.0
  %164 = vmatprep.subr.mxu0 0.0
  %165 = vmatpush1.msra.mxu0 0.0
  %166 = vmatprep.subr.mxu0 0.0
  %167 = vmatpush1.msra.mxu0 0.0
  %168 = vmatprep.subr.mxu0 0.0
  %169 = vmatpush1.msra.mxu0 0.0
  %170 = vmatprep.subr.mxu0 0.0
  %171 = vmatpush1.msra.mxu0 0.0
  %172 = vmatprep.subr.mxu0 0.0
  %173 = vmatpush1.msra.mxu0 0.0
  %174 = vmatprep.subr.mxu0 0.0
  %175 = vmatpush1.msra.mxu0 0.0
  %176 = vmatprep.subr.mxu0 0.0
  %177 = vmatpush1.msra.mxu0 0.0
  %178 = vmatprep.subr.mxu0 0.0
  %179 = vmatpush1.msra.mxu0 0.0
  %180 = vmatprep.mubr.f32.mxu0 0.0
  %181 = vmatmul.mubr.f32.gmra.mrb[0].mxu0 %v84
  %v182 = vpop.f32.mrb[0].mxu0
  %v183 = vadd.f32 %v41, %v182
  %v184 = vpop.f32.mrb[0].mxu0
  %v185 = vadd.f32 %v41, %v184
  %186 = vmatprep.mubr.f32.mxu0 0.0
  %187 = vmatmul.mubr.f32.gmra.mrb[0].mxu0 %v87
  %v188 = vpop.f32.mrb[0].mxu0
  %v189 = vadd.f32 %v46, %v188
  %v190 = vpop.f32.mrb[0].mxu0
  %v191 = vadd.f32 %v46, %v190
  %192 = vmatprep.mubr.f32.mxu0 0.0
  %193 = vmatmul.mubr.f32.gmra.mrb[0].mxu0 %v90
  %v194 = vpop.f32.mrb[0].mxu0
  %v195 = vadd.f32 %v51, %v194
  %v196 = vpop.f32.mrb[0].mxu0
  %v197 = vadd.f32 %v51, %v196
  %198 = vmatprep.mubr.f32.mxu0 0.0
  %199 = vmatmul.mubr.f32.gmra.mrb[0].mxu0 %v93
  %v200 = vpop.f32.mrb[0].mxu0
  %v201 = vadd.f32 %v56, %v200
  %v202 = vpop.f32.mrb[0].mxu0
  %v203 = vadd.f32 %v56, %v202
  %204 = vmatprep.mubr.f32.mxu0 0.0
  %205 = vmatmul.mubr.f32.gmra.mrb[0].mxu0 %v96
  %v206 = vpop.f32.mrb[0].mxu0
  %v207 = vadd.f32 %v61, %v206
  %v208 = vpop.f32.mrb[0].mxu0
  %v209 = vadd.f32 %v61, %v208
  %210 = vmatprep.mubr.f32.mxu0 0.0
  %211 = vmatmul.mubr.f32.gmra.mrb[0].mxu0 %v99
  %v212 = vpop.f32.mrb[0].mxu0
  %v213 = vadd.f32 %v66, %v212
  %v214 = vpop.f32.mrb[0].mxu0
  %v215 = vadd.f32 %v66, %v214
  %216 = vmatprep.mubr.f32.mxu0 0.0
  %217 = vmatmul.mubr.f32.gmra.mrb[0].mxu0 %v102
  %v218 = vpop.f32.mrb[0].mxu0
  %v219 = vadd.f32 %v71, %v218
  %v220 = vpop.f32.mrb[0].mxu0
  %v221 = vadd.f32 %v71, %v220
  %222 = vmatprep.mubr.f32.mxu0 0.0
  %223 = vmatmul.mubr.f32.gmra.mrb[0].mxu0 %v105
  %v224 = vpop.f32.mrb[0].mxu0
  %v225 = vadd.f32 %v76, %v224
  %v226 = vpop.f32.mrb[0].mxu0
  %v227 = vadd.f32 %v76, %v226
  %228 = vdwg.mxu0
  %229 = vmatprep.subr.mxu0 %v114
  %230 = vmatpush1.msra.mxu0 %v112
  %231 = vmatprep.subr.mxu0 0.0
  %232 = vmatpush1.msra.mxu0 0.0
  %233 = vmatprep.subr.mxu0 0.0
  %234 = vmatpush1.msra.mxu0 0.0
  %235 = vmatprep.subr.mxu0 0.0
  %236 = vmatpush1.msra.mxu0 0.0
  %237 = vmatprep.subr.mxu0 0.0
  %238 = vmatpush1.msra.mxu0 0.0
  %239 = vmatprep.subr.mxu0 0.0
  %240 = vmatpush1.msra.mxu0 0.0
  %241 = vmatprep.subr.mxu0 0.0
  %242 = vmatpush1.msra.mxu0 0.0
  %243 = vmatprep.subr.mxu0 0.0
  %244 = vmatpush1.msra.mxu0 0.0
  %245 = vmatprep.subr.mxu0 0.0
  %246 = vmatpush1.msra.mxu0 0.0
  %247 = vmatprep.subr.mxu0 0.0
  %248 = vmatpush1.msra.mxu0 0.0
  %249 = vmatprep.subr.mxu0 0.0
  %250 = vmatpush1.msra.mxu0 0.0
  %251 = vmatprep.subr.mxu0 0.0
  %252 = vmatpush1.msra.mxu0 0.0
  %253 = vmatprep.subr.mxu0 0.0
  %254 = vmatpush1.msra.mxu0 0.0
  %255 = vmatprep.subr.mxu0 0.0
  %256 = vmatpush1.msra.mxu0 0.0
  %257 = vmatprep.subr.mxu0 0.0
  %258 = vmatpush1.msra.mxu0 0.0
  %259 = vmatprep.subr.mxu0 0.0
  %260 = vmatpush1.msra.mxu0 0.0
  %261 = vmatprep.subr.mxu0 0.0
  %262 = vmatpush1.msra.mxu0 0.0
  %263 = vmatprep.subr.mxu0 0.0
  %264 = vmatpush1.msra.mxu0 0.0
  %265 = vmatprep.subr.mxu0 0.0
  %266 = vmatpush1.msra.mxu0 0.0
  %267 = vmatprep.subr.mxu0 0.0
  %268 = vmatpush1.msra.mxu0 0.0
  %269 = vmatprep.subr.mxu0 0.0
  %270 = vmatpush1.msra.mxu0 0.0
  %271 = vmatprep.subr.mxu0 0.0
  %272 = vmatpush1.msra.mxu0 0.0
  %273 = vmatprep.subr.mxu0 0.0
  %274 = vmatpush1.msra.mxu0 0.0
  %275 = vmatprep.subr.mxu0 0.0
  %276 = vmatpush1.msra.mxu0 0.0
  %277 = vmatprep.subr.mxu0 0.0
  %278 = vmatpush1.msra.mxu0 0.0
  %279 = vmatprep.subr.mxu0 0.0
  %280 = vmatpush1.msra.mxu0 0.0
  %281 = vmatprep.subr.mxu0 0.0
  %282 = vmatpush1.msra.mxu0 0.0
  %283 = vmatprep.subr.mxu0 0.0
  %284 = vmatpush1.msra.mxu0 0.0
  %285 = vmatprep.subr.mxu0 0.0
  %286 = vmatpush1.msra.mxu0 0.0
  %287 = vmatprep.subr.mxu0 0.0
  %288 = vmatpush1.msra.mxu0 0.0
  %289 = vmatprep.subr.mxu0 0.0
  %290 = vmatpush1.msra.mxu0 0.0
  %291 = vmatprep.subr.mxu0 0.0
  %292 = vmatpush1.msra.mxu0 0.0
  %293 = vmatprep.mubr.f32.mxu0 0.0
  %294 = vmatmul.mubr.f32.gmra.mrb[0].mxu0 %v84
  %v295 = vpop.f32.mrb[0].mxu0
  %v296 = vadd.f32 %v41, %v295
  %v297 = vpop.f32.mrb[0].mxu0
  %v298 = vadd.f32 %v41, %v297
  %299 = vmatprep.mubr.f32.mxu0 0.0
  %300 = vmatmul.mubr.f32.gmra.mrb[0].mxu0 %v87
  %v301 = vpop.f32.mrb[0].mxu0
  %v302 = vadd.f32 %v46, %v301
  %v303 = vpop.f32.mrb[0].mxu0
  %v304 = vadd.f32 %v46, %v303
  %305 = vmatprep.mubr.f32.mxu0 0.0
  %306 = vmatmul.mubr.f32.gmra.mrb[0].mxu0 %v90
  %v307 = vpop.f32.mrb[0].mxu0
  %v308 = vadd.f32 %v51, %v307
  %v309 = vpop.f32.mrb[0].mxu0
  %v310 = vadd.f32 %v51, %v309
  %311 = vmatprep.mubr.f32.mxu0 0.0
  %312 = vmatmul.mubr.f32.gmra.mrb[0].mxu0 %v93
  %v313 = vpop.f32.mrb[0].mxu0
  %v314 = vadd.f32 %v56, %v313
  %v315 = vpop.f32.mrb[0].mxu0
  %v316 = vadd.f32 %v56, %v315
  %317 = vmatprep.mubr.f32.mxu0 0.0
  %318 = vmatmul.mubr.f32.gmra.mrb[0].mxu0 %v96
  %v319 = vpop.f32.mrb[0].mxu0
  %v320 = vadd.f32 %v61, %v319
  %v321 = vpop.f32.mrb[0].mxu0
  %v322 = vadd.f32 %v61, %v321
  %323 = vmatprep.mubr.f32.mxu0 0.0
  %324 = vmatmul.mubr.f32.gmra.mrb[0].mxu0 %v99
  %v325 = vpop.f32.mrb[0].mxu0
  %v326 = vadd.f32 %v66, %v325
  %v327 = vpop.f32.mrb[0].mxu0
  %v328 = vadd.f32 %v66, %v327
  %329 = vmatprep.mubr.f32.mxu0 0.0
  %330 = vmatmul.mubr.f32.gmra.mrb[0].mxu0 %v102
  %v331 = vpop.f32.mrb[0].mxu0
  %v332 = vadd.f32 %v71, %v331
  %v333 = vpop.f32.mrb[0].mxu0
  %v334 = vadd.f32 %v71, %v333
  %335 = vmatprep.mubr.f32.mxu0 0.0
  %336 = vmatmul.mubr.f32.gmra.mrb[0].mxu0 %v105
  %v337 = vpop.f32.mrb[0].mxu0
  %v338 = vadd.f32 %v76, %v337
  %v339 = vpop.f32.mrb[0].mxu0
  %v340 = vadd.f32 %v76, %v339
  %341 = vdwg.mxu0
  %v342 = vmax.f32 %v183, 0.0
  %v343 = vmax.f32 %v185, 0.0
  %v344 = vmax.f32 %v296, 0.0
  %v345 = vmax.f32 %v298, 0.0
  %v346 = vmax.f32 %v189, 0.0
  %v347 = vmax.f32 %v191, 0.0
  %v348 = vmax.f32 %v302, 0.0
  %v349 = vmax.f32 %v304, 0.0
  %v350 = vmax.f32 %v195, 0.0
  %v351 = vmax.f32 %v197, 0.0
  %v352 = vmax.f32 %v308, 0.0
  %v353 = vmax.f32 %v310, 0.0
  %v354 = vmax.f32 %v201, 0.0
  %v355 = vmax.f32 %v203, 0.0
  %v356 = vmax.f32 %v314, 0.0
  %v357 = vmax.f32 %v316, 0.0
  %v358 = vmax.f32 %v207, 0.0
  %v359 = vmax.f32 %v209, 0.0
  %v360 = vmax.f32 %v320, 0.0
  %v361 = vmax.f32 %v322, 0.0
  %v362 = vmax.f32 %v213, 0.0
  %v363 = vmax.f32 %v215, 0.0
  %v364 = vmax.f32 %v326, 0.0
  %v365 = vmax.f32 %v328, 0.0
  %v366 = vmax.f32 %v219, 0.0
  %v367 = vmax.f32 %v221, 0.0
  %v368 = vmax.f32 %v332, 0.0
  %v369 = vmax.f32 %v334, 0.0
  %v370 = vmax.f32 %v225, 0.0
  %v371 = vmax.f32 %v227, 0.0
  %v372 = vmax.f32 %v338, 0.0
  %v373 = vmax.f32 %v340, 0.0
  %v374 = vld [vmem:[%s3] sm:$0xff]
  %v375 = vld [vmem:[%s3 + $0x8] sm:$0xff]
  %v376 = vld [vmem:[%s4] sm:$0xff]
  %v377 = vld [vmem:[%s4 + $0x8] sm:$0xff]
  %379 = vset.pattern.permute.xlu0 0
  %380 = vperm.xlu0 %379, %v376
  %v381 = vpop.permute.xlu0 %380
  %384 = vset.pattern.permute.xlu0 0
  %385 = vperm.xlu0 %384, %v377
  %v386 = vpop.permute.xlu0 %385
  %vm388 = vcmask 523264
  %v390 = vsel %vm388, %v374, 0
  %v393 = vsel %vm388, %v375, 0
  %395 = vmatprep.subr.mxu0 %v343
  %396 = vmatpush1.msra.mxu0 %v342
  %397 = vmatprep.subr.mxu0 %v347
  %398 = vmatpush1.msra.mxu0 %v346
  %399 = vmatprep.subr.mxu0 %v351
  %400 = vmatpush1.msra.mxu0 %v350
  %401 = vmatprep.subr.mxu0 %v355
  %402 = vmatpush1.msra.mxu0 %v354
  %403 = vmatprep.subr.mxu0 %v359
  %404 = vmatpush1.msra.mxu0 %v358
  %405 = vmatprep.subr.mxu0 %v363
  %406 = vmatpush1.msra.mxu0 %v362
  %407 = vmatprep.subr.mxu0 %v367
  %408 = vmatpush1.msra.mxu0 %v366
  %409 = vmatprep.subr.mxu0 %v371
  %410 = vmatpush1.msra.mxu0 %v370
  %411 = vmatprep.subr.mxu0 0.0
  %412 = vmatpush1.msra.mxu0 0.0
  %413 = vmatprep.subr.mxu0 0.0
  %414 = vmatpush1.msra.mxu0 0.0
  %415 = vmatprep.subr.mxu0 0.0
  %416 = vmatpush1.msra.mxu0 0.0
  %417 = vmatprep.subr.mxu0 0.0
  %418 = vmatpush1.msra.mxu0 0.0
  %419 = vmatprep.subr.mxu0 0.0
  %420 = vmatpush1.msra.mxu0 0.0
  %421 = vmatprep.subr.mxu0 0.0
  %422 = vmatpush1.msra.mxu0 0.0
  %423 = vmatprep.subr.mxu0 0.0
  %424 = vmatpush1.msra.mxu0 0.0
  %425 = vmatprep.subr.mxu0 0.0
  %426 = vmatpush1.msra.mxu0 0.0
  %427 = vmatprep.subr.mxu0 0.0
  %428 = vmatpush1.msra.mxu0 0.0
  %429 = vmatprep.subr.mxu0 0.0
  %430 = vmatpush1.msra.mxu0 0.0
  %431 = vmatprep.subr.mxu0 0.0
  %432 = vmatpush1.msra.mxu0 0.0
  %433 = vmatprep.subr.mxu0 0.0
  %434 = vmatpush1.msra.mxu0 0.0
  %435 = vmatprep.subr.mxu0 0.0
  %436 = vmatpush1.msra.mxu0 0.0
  %437 = vmatprep.subr.mxu0 0.0
  %438 = vmatpush1.msra.mxu0 0.0
  %439 = vmatprep.subr.mxu0 0.0
  %440 = vmatpush1.msra.mxu0 0.0
  %441 = vmatprep.subr.mxu0 0.0
  %442 = vmatpush1.msra.mxu0 0.0
  %443 = vmatprep.subr.mxu0 0.0
  %444 = vmatpush1.msra.mxu0 0.0
  %445 = vmatprep.subr.mxu0 0.0
  %446 = vmatpush1.msra.mxu0 0.0
  %447 = vmatprep.subr.mxu0 0.0
  %448 = vmatpush1.msra.mxu0 0.0
  %449 = vmatprep.subr.mxu0 0.0
  %450 = vmatpush1.msra.mxu0 0.0
  %451 = vmatprep.subr.mxu0 0.0
  %452 = vmatpush1.msra.mxu0 0.0
  %453 = vmatprep.subr.mxu0 0.0
  %454 = vmatpush1.msra.mxu0 0.0
  %455 = vmatprep.subr.mxu0 0.0
  %456 = vmatpush1.msra.mxu0 0.0
  %457 = vmatprep.subr.mxu0 0.0
  %458 = vmatpush1.msra.mxu0 0.0
  %459 = vmatprep.mubr.f32.mxu0 0.0
  %460 = vmatmul.mubr.f32.gmra.mrb[0].mxu0 %v390
  %v461 = vpop.f32.mrb[0].mxu0
  %v462 = vadd.f32 %v381, %v461
  %v463 = vpop.f32.mrb[0].mxu0
  %v464 = vadd.f32 %v381, %v463
  %465 = vmatprep.mubr.f32.mxu0 0.0
  %466 = vmatmul.mubr.f32.gmra.mrb[0].mxu0 %v393
  %v467 = vpop.f32.mrb[0].mxu0
  %v468 = vadd.f32 %v386, %v467
  %v469 = vpop.f32.mrb[0].mxu0
  %v470 = vadd.f32 %v386, %v469
  %471 = vdwg.mxu0
  %472 = vmatprep.subr.mxu0 %v345
  %473 = vmatpush1.msra.mxu0 %v344
  %474 = vmatprep.subr.mxu0 %v349
  %475 = vmatpush1.msra.mxu0 %v348
  %476 = vmatprep.subr.mxu0 %v353
  %477 = vmatpush1.msra.mxu0 %v352
  %478 = vmatprep.subr.mxu0 %v357
  %479 = vmatpush1.msra.mxu0 %v356
  %480 = vmatprep.subr.mxu0 %v361
  %481 = vmatpush1.msra.mxu0 %v360
  %482 = vmatprep.subr.mxu0 %v365
  %483 = vmatpush1.msra.mxu0 %v364
  %484 = vmatprep.subr.mxu0 %v369
  %485 = vmatpush1.msra.mxu0 %v368
  %486 = vmatprep.subr.mxu0 %v373
  %487 = vmatpush1.msra.mxu0 %v372
  %488 = vmatprep.subr.mxu0 0.0
  %489 = vmatpush1.msra.mxu0 0.0
  %490 = vmatprep.subr.mxu0 0.0
  %491 = vmatpush1.msra.mxu0 0.0
  %492 = vmatprep.subr.mxu0 0.0
  %493 = vmatpush1.msra.mxu0 0.0
  %494 = vmatprep.subr.mxu0 0.0
  %495 = vmatpush1.msra.mxu0 0.0
  %496 = vmatprep.subr.mxu0 0.0
  %497 = vmatpush1.msra.mxu0 0.0
  %498 = vmatprep.subr.mxu0 0.0
  %499 = vmatpush1.msra.mxu0 0.0
  %500 = vmatprep.subr.mxu0 0.0
  %501 = vmatpush1.msra.mxu0 0.0
  %502 = vmatprep.subr.mxu0 0.0
  %503 = vmatpush1.msra.mxu0 0.0
  %504 = vmatprep.subr.mxu0 0.0
  %505 = vmatpush1.msra.mxu0 0.0
  %506 = vmatprep.subr.mxu0 0.0
  %507 = vmatpush1.msra.mxu0 0.0
  %508 = vmatprep.subr.mxu0 0.0
  %509 = vmatpush1.msra.mxu0 0.0
  %510 = vmatprep.subr.mxu0 0.0
  %511 = vmatpush1.msra.mxu0 0.0
  %512 = vmatprep.subr.mxu0 0.0
  %513 = vmatpush1.msra.mxu0 0.0
  %514 = vmatprep.subr.mxu0 0.0
  %515 = vmatpush1.msra.mxu0 0.0
  %516 = vmatprep.subr.mxu0 0.0
  %517 = vmatpush1.msra.mxu0 0.0
  %518 = vmatprep.subr.mxu0 0.0
  %519 = vmatpush1.msra.mxu0 0.0
  %520 = vmatprep.subr.mxu0 0.0
  %521 = vmatpush1.msra.mxu0 0.0
  %522 = vmatprep.subr.mxu0 0.0
  %523 = vmatpush1.msra.mxu0 0.0
  %524 = vmatprep.subr.mxu0 0.0
  %525 = vmatpush1.msra.mxu0 0.0
  %526 = vmatprep.subr.mxu0 0.0
  %527 = vmatpush1.msra.mxu0 0.0
  %528 = vmatprep.subr.mxu0 0.0
  %529 = vmatpush1.msra.mxu0 0.0
  %530 = vmatprep.subr.mxu0 0.0
  %531 = vmatpush1.msra.mxu0 0.0
  %532 = vmatprep.subr.mxu0 0.0
  %533 = vmatpush1.msra.mxu0 0.0
  %534 = vmatprep.subr.mxu0 0.0
  %535 = vmatpush1.msra.mxu0 0.0
  %536 = vmatprep.mubr.f32.mxu0 0.0
  %537 = vmatmul.mubr.f32.gmra.mrb[0].mxu0 %v390
  %v538 = vpop.f32.mrb[0].mxu0
  %v539 = vadd.f32 %v381, %v538
  %v540 = vpop.f32.mrb[0].mxu0
  %v541 = vadd.f32 %v381, %v540
  %542 = vmatprep.mubr.f32.mxu0 0.0
  %543 = vmatmul.mubr.f32.gmra.mrb[0].mxu0 %v393
  %v544 = vpop.f32.mrb[0].mxu0
  %v545 = vadd.f32 %v386, %v544
  %v546 = vpop.f32.mrb[0].mxu0
  %v547 = vadd.f32 %v386, %v546
  %548 = vdwg.mxu0
  %v549 = vxor.u32 %v462, 2147483648
  %v550 = vxor.u32 %v464, 2147483648
  %v551 = vxor.u32 %v539, 2147483648
  %v552 = vxor.u32 %v541, 2147483648
  %v553 = vxor.u32 %v468, 2147483648
  %v554 = vxor.u32 %v470, 2147483648
  %v555 = vxor.u32 %v545, 2147483648
  %v556 = vxor.u32 %v547, 2147483648
  %v557 = vmul.f32 %v549, 1.442695
  %v558 = vpow.pop %v557
  %v559 = vmul.f32 %v550, 1.442695
  %v560 = vpow.pop %v559
  %v561 = vmul.f32 %v551, 1.442695
  %v562 = vpow.pop %v561
  %v563 = vmul.f32 %v552, 1.442695
  %v564 = vpow.pop %v563
  %v565 = vmul.f32 %v553, 1.442695
  %v566 = vpow.pop %v565
  %v567 = vmul.f32 %v554, 1.442695
  %v568 = vpow.pop %v567
  %v569 = vmul.f32 %v555, 1.442695
  %v570 = vpow.pop %v569
  %v571 = vmul.f32 %v556, 1.442695
  %v572 = vpow.pop %v571
  %v573 = vadd.f32 %v558, 1.0
  %v574 = vadd.f32 %v560, 1.0
  %v575 = vadd.f32 %v562, 1.0
  %v576 = vadd.f32 %v564, 1.0
  %v577 = vadd.f32 %v566, 1.0
  %v578 = vadd.f32 %v568, 1.0
  %v579 = vadd.f32 %v570, 1.0
  %v580 = vadd.f32 %v572, 1.0
  %v581 = vrcp.pop %v573
  %v582 = vmul.f32 1.0, %v581
  %v583 = vrcp.pop %v574
  %v584 = vmul.f32 1.0, %v583
  %v585 = vrcp.pop %v575
  %v586 = vmul.f32 1.0, %v585
  %v587 = vrcp.pop %v576
  %v588 = vmul.f32 1.0, %v587
  %v589 = vrcp.pop %v577
  %v590 = vmul.f32 1.0, %v589
  %v591 = vrcp.pop %v578
  %v592 = vmul.f32 1.0, %v591
  %v593 = vrcp.pop %v579
  %v594 = vmul.f32 1.0, %v593
  %v595 = vrcp.pop %v580
  %v596 = vmul.f32 1.0, %v595
  %597 = vst [vmem:[%s5] sm:$0xff] %v582
  %598 = vst [vmem:[%s5 + $0x8] sm:$0xff] %v584
  %599 = vst [vmem:[%s5 + $0x10] sm:$0xff] %v586
  %600 = vst [vmem:[%s5 + $0x18] sm:$0xff] %v588
  %601 = vst [vmem:[%s5 + $0x20] sm:$0xff] %v590
  %602 = vst [vmem:[%s5 + $0x28] sm:$0xff] %v592
  %603 = vst [vmem:[%s5 + $0x30] sm:$0xff] %v594
  %604 = vst [vmem:[%s5 + $0x38] sm:$0xff] %v596
  // Predicated region
  $region22: #{decoder_forward.1} parent=0 // pred_check
    _
  $region23: #{decoder_forward.1} parent=0 // pred_check_branch
    %606 = sbr.rel (0) target = $region25
  $region24: #{decoder_forward.1} parent=0 // pred_region
    _
  $region25: #{decoder_forward.1} parent=0 // pred_fallthru
    _
  // Predicated region
  $region26: #{decoder_forward.1} parent=0 // pred_check
    _
  $region27: #{decoder_forward.1} parent=0 // pred_check_branch
    %608 = sbr.rel (0) target = $region29
  $region28: #{decoder_forward.1} parent=0 // pred_region
    _
  $region29: #{decoder_forward.1} parent=0 // pred_fallthru
    _

</llo_original>
